<compile_context>
chip_gen: v6e
topology: v6e:2x2x1
jax: 0.10.0
libtpu: 0.0.40
codegen_flags: <defaults>
</compile_context>

<pallas_src>
import functools

import jax
import jax.numpy as jnp
from jax.experimental import pallas as pl
from jax.experimental.pallas import tpu as pltpu


def _round_up(x: int, m: int) -> int:
    return ((x + m - 1) // m) * m


# ---------------------------------------------------------------------------
# Kernel: full 3-layer MLP on one (TILE_B, obs_dim) batch tile.
#   obs_ref : (TILE_B, obs_dim) bf16  (un-padded lanes; only real features DMA'd)
#   w_ref   : (3, P, P)         bf16  (packed zero-padded weights; VMEM-resident)
#   b_ref   : (8, P)            f32   (rows 0..2 = b1, b2, b3; rest zero)
#   out_ref : (TILE_B, A_pad)   f32   (narrow output; A_pad = round_up(action_dim, 8))
#   x_pad   : (TILE_B, P)       bf16  VMEM scratch used to lane-pad obs to P
# ---------------------------------------------------------------------------
def actor_mlp_kernel(obs_ref, w_ref, b_ref, out_ref, x_pad):
    obs_dim = obs_ref.shape[-1]

    # Lane-pad obs to P inside VMEM (padded lanes multiply zero-padded w1 rows,
    # so the result is unchanged).  Re-zero every grid step so megacore
    # sharding of the batch axis never sees stale pad lanes.
    x_pad[...] = jnp.zeros_like(x_pad)
    x_pad[:, :obs_dim] = obs_ref[...]
    x = x_pad[...]                                      # (TILE_B, P) bf16

    # Layer 1: Linear + ReLU   (bf16 x bf16 -> f32 accumulate)
    h1 = jnp.dot(x, w_ref[0], preferred_element_type=jnp.float32) + b_ref[0:1, :]
    h1 = jnp.maximum(h1, 0.0)

    # Layer 2: Linear + ReLU
    h2 = jnp.dot(h1.astype(jnp.bfloat16), w_ref[1],
                 preferred_element_type=jnp.float32) + b_ref[1:2, :]
    h2 = jnp.maximum(h2, 0.0)

    # Layer 3: Linear (no activation) -> mu ; narrow store (padded cols of
    # w3/b3 are zero, so dropping lanes >= A_pad loses nothing).
    mu = jnp.dot(h2.astype(jnp.bfloat16), w_ref[2],
                 preferred_element_type=jnp.float32) + b_ref[2:3, :]
    out_ref[...] = mu[:, :out_ref.shape[-1]].astype(out_ref.dtype)


# ---------------------------------------------------------------------------
# Parameter packing (do ONCE; reuse the slabs across rollout / training steps).
# ---------------------------------------------------------------------------
def pack_actor_params(params, obs_dim, action_dim, hidden_size):
    P = _round_up(max(obs_dim, hidden_size, action_dim), 128)
    w_slab = jnp.zeros((3, P, P), jnp.float32)
    w_slab = w_slab.at[0, :obs_dim, :hidden_size].set(params["w1"])
    w_slab = w_slab.at[1, :hidden_size, :hidden_size].set(params["w2"])
    w_slab = w_slab.at[2, :hidden_size, :action_dim].set(params["w3"])
    b_slab = jnp.zeros((8, P), jnp.float32)
    b_slab = b_slab.at[0, :hidden_size].set(params["b1"][0])
    b_slab = b_slab.at[1, :hidden_size].set(params["b2"][0])
    b_slab = b_slab.at[2, :action_dim].set(params["b3"][0])
    return w_slab.astype(jnp.bfloat16), b_slab


# ---------------------------------------------------------------------------
# Batch tile selection.
#  - Up to B=512: a single grid step (splitting only adds ~600-cycle step
#    overhead; identical on v5e/v6e/v7x).
#  - Larger B: at least 2 grid steps so the "parallel" batch axis can be
#    sharded across v7x's 2 TensorCores; tile capped at 1024 (VMEM is never a
#    constraint: even tile_b=1024 uses ~1 MiB of blocks + scratch).
# ---------------------------------------------------------------------------
def _choose_tile_b(batch: int) -> int:
    b8 = _round_up(max(batch, 1), 8)
    if b8 <= 512:
        return b8
    return min(1024, _round_up(pl.cdiv(b8, 2), 8))


# ---------------------------------------------------------------------------
# Wrapper: batch-tiled pallas_call.
# ---------------------------------------------------------------------------
@functools.partial(jax.jit, static_argnames=("action_dim", "tile_b"))
def actor_forward(obs, w_slab, b_slab, *, action_dim, tile_b=None):
    B, obs_dim = obs.shape
    P = w_slab.shape[-1]
    A_pad = min(P, _round_up(action_dim, 8))

    if tile_b is None:
        tile_b = _choose_tile_b(B)
    else:
        tile_b = _round_up(int(tile_b), 8)
    B_pad = _round_up(B, tile_b)

    # bf16 obs, no lane padding in HBM; only pad the batch rows the grid needs.
    obs_bf = obs.astype(jnp.bfloat16)
    if B_pad != B:
        obs_bf = jnp.zeros((B_pad, obs_dim), jnp.bfloat16).at[:B].set(obs_bf)

    # Constant index_map -> single buffer for the resident weight/bias slabs.
    resident = dict(pipeline_mode=pl.Buffered(1))

    out = pl.pallas_call(
        actor_mlp_kernel,
        out_shape=jax.ShapeDtypeStruct((B_pad, A_pad), jnp.float32),
        grid=(B_pad // tile_b,),
        in_specs=[
            pl.BlockSpec((tile_b, obs_dim), lambda i: (i, 0)),        # obs: tiled over batch
            pl.BlockSpec((3, P, P), lambda i: (0, 0, 0), **resident),  # weights: resident
            pl.BlockSpec((8, P), lambda i: (0, 0), **resident),        # biases: resident
        ],
        out_specs=pl.BlockSpec((tile_b, A_pad), lambda i: (i, 0)),
        scratch_shapes=[pltpu.VMEM((tile_b, P), jnp.bfloat16)],
        compiler_params=pltpu.CompilerParams(
            dimension_semantics=("parallel",)),
    )(obs_bf, w_slab, b_slab)

    return out[:B, :action_dim]


# ---------------------------------------------------------------------------
# Init (mimics PyTorch nn.Linear default: U(-1/sqrt(fan_in), 1/sqrt(fan_in))).
# Weights stored (in_features, out_features) so the kernel does x @ W + b.
# ---------------------------------------------------------------------------
def init_params(key, obs_dim, action_dim, hidden_size=128):
    ks = jax.random.split(key, 6)

    def linear(kw, kb, fan_in, fan_out):
        bound = 1.0 / jnp.sqrt(jnp.float32(fan_in))
        w = jax.random.uniform(kw, (fan_in, fan_out), jnp.float32, -bound, bound)
        b = jax.random.uniform(kb, (1, fan_out), jnp.float32, -bound, bound)
        return w, b

    w1, b1 = linear(ks[0], ks[1], obs_dim, hidden_size)
    w2, b2 = linear(ks[2], ks[3], hidden_size, hidden_size)
    w3, b3 = linear(ks[4], ks[5], hidden_size, action_dim)
    return {"w1": w1, "b1": b1, "w2": w2, "b2": b2, "w3": w3, "b3": b3}


# Pure-JAX references.
def reference_forward_f32(obs, p):
    h1 = jnp.maximum(obs @ p["w1"] + p["b1"], 0.0)
    h2 = jnp.maximum(h1 @ p["w2"] + p["b2"], 0.0)
    return h2 @ p["w3"] + p["b3"]


def reference_forward_bf16(obs, p):
    bf = jnp.bfloat16
    h1 = jnp.dot(obs.astype(bf), p["w1"].astype(bf),
                 preferred_element_type=jnp.float32) + p["b1"]
    h1 = jnp.maximum(h1, 0.0)
    h2 = jnp.dot(h1.astype(bf), p["w2"].astype(bf),
                 preferred_element_type=jnp.float32) + p["b2"]
    h2 = jnp.maximum(h2, 0.0)
    return jnp.dot(h2.astype(bf), p["w3"].astype(bf),
                   preferred_element_type=jnp.float32) + p["b3"]


if __name__ == "__main__":
    # simple_spread-like dims: obs_dim=18, action_dim=5, hidden=128
    OBS_DIM, ACTION_DIM, HIDDEN = 18, 5, 128

    key = jax.random.PRNGKey(0)
    k_obs, k_params, k_obs_big = jax.random.split(key, 3)

    params = init_params(k_params, OBS_DIM, ACTION_DIM, HIDDEN)
    # Pack weights once; the packed slabs are what a rollout/training loop reuses.
    w_slab, b_slab = pack_actor_params(params, OBS_DIM, ACTION_DIM, HIDDEN)

    # 1) Rollout-sized batch (single grid step).
    obs = jax.random.normal(k_obs, (8, OBS_DIM), jnp.float32)
    mu = jax.block_until_ready(actor_forward(obs, w_slab, b_slab,
                                             action_dim=ACTION_DIM))
    assert mu.shape == (8, ACTION_DIM), mu.shape
    assert jnp.allclose(mu, reference_forward_bf16(obs, params),
                        atol=2e-4, rtol=2e-4), "mismatch vs bf16 reference"
    assert jnp.allclose(mu, reference_forward_f32(obs, params),
                        atol=5e-2, rtol=5e-2), "mismatch vs f32 reference"

    # 2) Training-sized batch: exercises batch-row padding + a 2-step grid
    #    (the megacore-parallel path) and the persistent lane-pad scratch.
    obs_big = jax.random.normal(k_obs_big, (600, OBS_DIM), jnp.float32)
    mu_big = jax.block_until_ready(actor_forward(obs_big, w_slab, b_slab,
                                                 action_dim=ACTION_DIM))
    assert mu_big.shape == (600, ACTION_DIM), mu_big.shape
    assert jnp.allclose(mu_big, reference_forward_bf16(obs_big, params),
                        atol=2e-4, rtol=2e-4), "mismatch vs bf16 reference (big batch)"

    print("KERNEL_OK")
</pallas_src>

<mosaic_0001>
module attributes {stable_mosaic.version = 11 : i64} {
  func.func @actor_mlp_kernel(%arg0: i32, %arg1: memref<8x18xbf16, #tpu.memory_space<vmem>>, %arg2: memref<3x128x128xbf16, #tpu.memory_space<vmem>>, %arg3: memref<8x128xf32, #tpu.memory_space<vmem>>, %arg4: memref<8x8xf32, #tpu.memory_space<vmem>>, %arg5: memref<8x128xbf16, #tpu.memory_space<vmem>>) attributes {dimension_semantics = [#tpu.dimension_semantics<parallel>], iteration_bounds = array<i64: 1>, scalar_prefetch = 0 : i64, scratch_operands = 1 : i64, tpu.core_type = #tpu.core_type<tc>, window_params = [{transform_indices = @transform_0, window_bounds = array<i64: 8, 18>}, {pipeline_mode = #tpu.pipeline_mode<synchronous>, transform_indices = @transform_1, window_bounds = array<i64: 3, 128, 128>}, {pipeline_mode = #tpu.pipeline_mode<synchronous>, transform_indices = @transform_2, window_bounds = array<i64: 8, 128>}, {transform_indices = @transform_3, window_bounds = array<i64: 8, 8>}]} {
    %cst = arith.constant 0.000000e+00 : bf16
    %0 = vector.broadcast %cst : bf16 to vector<8x128xbf16>
    %c0 = arith.constant 0 : index
    %c0_0 = arith.constant 0 : index
    %1 = vector.load %arg5[%c0, %c0_0] : memref<8x128xbf16, #tpu.memory_space<vmem>>, vector<8x128xbf16>
    tpu.vector_store %arg5[%c0, %c0_0], %0 {strides = array<i32>} : memref<8x128xbf16, #tpu.memory_space<vmem>>, vector<8x128xbf16>,
    %c0_1 = arith.constant 0 : index
    %c0_2 = arith.constant 0 : index
    %2 = vector.load %arg1[%c0_1, %c0_2] : memref<8x18xbf16, #tpu.memory_space<vmem>>, vector<8x18xbf16>
    %c0_3 = arith.constant 0 : index
    %c0_4 = arith.constant 0 : index
    %3 = vector.load %arg5[%c0_3, %c0_4] : memref<8x128xbf16, #tpu.memory_space<vmem>>, vector<8x18xbf16>
    tpu.vector_store %arg5[%c0_3, %c0_4], %2 {strides = array<i32>} : memref<8x128xbf16, #tpu.memory_space<vmem>>, vector<8x18xbf16>,
    %c0_5 = arith.constant 0 : index
    %c0_6 = arith.constant 0 : index
    %4 = vector.load %arg5[%c0_5, %c0_6] : memref<8x128xbf16, #tpu.memory_space<vmem>>, vector<8x128xbf16>
    %c0_7 = arith.constant 0 : index
    %c0_8 = arith.constant 0 : index
    %c0_9 = arith.constant 0 : index
    %5 = vector.load %arg2[%c0_7, %c0_8, %c0_9] : memref<3x128x128xbf16, #tpu.memory_space<vmem>>, vector<1x128x128xbf16>
    %6 = vector.shape_cast %5 : vector<1x128x128xbf16> to vector<128x128xbf16>
    %cst_10 = arith.constant dense<0.000000e+00> : vector<8x128xf32>
    %7 = tpu.matmul %4, %6, %cst_10 {dimension_numbers = #tpu.dot_dimension_numbers<[1], [0], [0], [1], [0, 0, 1, 1], [], []>} : vector<8x128xbf16>, vector<128x128xbf16>, vector<8x128xf32> -> vector<8x128xf32>
    %c0_11 = arith.constant 0 : index
    %c0_12 = arith.constant 0 : index
    %8 = vector.load %arg3[%c0_11, %c0_12] : memref<8x128xf32, #tpu.memory_space<vmem>>, vector<1x128xf32>
    %9 = vector.broadcast %8 : vector<1x128xf32> to vector<8x128xf32>
    %10 = arith.addf %7, %9 : vector<8x128xf32>
    %cst_13 = arith.constant 0.000000e+00 : f32
    %11 = vector.broadcast %cst_13 : f32 to vector<8x128xf32>
    %12 = arith.maximumf %10, %11 : vector<8x128xf32>
    %13 = arith.truncf %12 : vector<8x128xf32> to vector<8x128xbf16>
    %c1 = arith.constant 1 : index
    %c0_14 = arith.constant 0 : index
    %c0_15 = arith.constant 0 : index
    %14 = vector.load %arg2[%c1, %c0_14, %c0_15] : memref<3x128x128xbf16, #tpu.memory_space<vmem>>, vector<1x128x128xbf16>
    %15 = vector.shape_cast %14 : vector<1x128x128xbf16> to vector<128x128xbf16>
    %cst_16 = arith.constant dense<0.000000e+00> : vector<8x128xf32>
    %16 = tpu.matmul %13, %15, %cst_16 {dimension_numbers = #tpu.dot_dimension_numbers<[1], [0], [0], [1], [0, 0, 1, 1], [], []>} : vector<8x128xbf16>, vector<128x128xbf16>, vector<8x128xf32> -> vector<8x128xf32>
    %c1_17 = arith.constant 1 : index
    %c0_18 = arith.constant 0 : index
    %17 = vector.load %arg3[%c1_17, %c0_18] : memref<8x128xf32, #tpu.memory_space<vmem>>, vector<1x128xf32>
    %18 = vector.broadcast %17 : vector<1x128xf32> to vector<8x128xf32>
    %19 = arith.addf %16, %18 : vector<8x128xf32>
    %cst_19 = arith.constant 0.000000e+00 : f32
    %20 = vector.broadcast %cst_19 : f32 to vector<8x128xf32>
    %21 = arith.maximumf %19, %20 : vector<8x128xf32>
    %22 = arith.truncf %21 : vector<8x128xf32> to vector<8x128xbf16>
    %c2 = arith.constant 2 : index
    %c0_20 = arith.constant 0 : index
    %c0_21 = arith.constant 0 : index
    %23 = vector.load %arg2[%c2, %c0_20, %c0_21] : memref<3x128x128xbf16, #tpu.memory_space<vmem>>, vector<1x128x128xbf16>
    %24 = vector.shape_cast %23 : vector<1x128x128xbf16> to vector<128x128xbf16>
    %cst_22 = arith.constant dense<0.000000e+00> : vector<8x128xf32>
    %25 = tpu.matmul %22, %24, %cst_22 {dimension_numbers = #tpu.dot_dimension_numbers<[1], [0], [0], [1], [0, 0, 1, 1], [], []>} : vector<8x128xbf16>, vector<128x128xbf16>, vector<8x128xf32> -> vector<8x128xf32>
    %c2_23 = arith.constant 2 : index
    %c0_24 = arith.constant 0 : index
    %26 = vector.load %arg3[%c2_23, %c0_24] : memref<8x128xf32, #tpu.memory_space<vmem>>, vector<1x128xf32>
    %27 = vector.broadcast %26 : vector<1x128xf32> to vector<8x128xf32>
    %28 = arith.addf %25, %27 : vector<8x128xf32>
    %29 = vector.extract_strided_slice %28 {offsets = [0, 0], sizes = [8, 8], strides = [1, 1]} : vector<8x128xf32> to vector<8x8xf32>
    %c0_25 = arith.constant 0 : index
    %c0_26 = arith.constant 0 : index
    %30 = vector.load %arg4[%c0_25, %c0_26] : memref<8x8xf32, #tpu.memory_space<vmem>>, vector<8x8xf32>
    tpu.vector_store %arg4[%c0_25, %c0_26], %29 {strides = array<i32>} : memref<8x8xf32, #tpu.memory_space<vmem>>, vector<8x8xf32>,
    return
  }
  func.func @transform_0(%arg0: i32) -> (i32, i32) {
    %c0_i32 = arith.constant 0 : i32
    %c0_i32_0 = arith.constant 0 : i32
    return %arg0, %c0_i32 : i32, i32
  }
  func.func @transform_1(%arg0: i32) -> (i32, i32, i32) {
    %c0_i32 = arith.constant 0 : i32
    %c0_i32_0 = arith.constant 0 : i32
    %c0_i32_1 = arith.constant 0 : i32
    %c0_i32_2 = arith.constant 0 : i32
    return %c0_i32, %c0_i32_0, %c0_i32_1 : i32, i32, i32
  }
  func.func @transform_2(%arg0: i32) -> (i32, i32) {
    %c0_i32 = arith.constant 0 : i32
    %c0_i32_0 = arith.constant 0 : i32
    %c0_i32_1 = arith.constant 0 : i32
    return %c0_i32, %c0_i32_0 : i32, i32
  }
  func.func @transform_3(%arg0: i32) -> (i32, i32) {
    %c0_i32 = arith.constant 0 : i32
    %c0_i32_0 = arith.constant 0 : i32
    return %arg0, %c0_i32 : i32, i32
  }
}

</mosaic_0001>

<llo_original>
// kernel: actor_forward.1
$region0: #{actor_forward.1}
  #allocation0 [shape = 'u32[]', space=smem, size = 0x4, offset = 0x4, fixed_abs, tag = 'smem constant byte address 0x4 - core index']
  #allocation1 [shape = 'u32[144,128]{1,0:T(1,128)}', space=vmem, size = 0x12000, scoped, tag = 'internal scratch']
  #allocation2 [shape = 'bf16[8,128]{1,0:T(8,128)(2,1)}', space=vmem, size = 0x800, scoped, tag = 'scratch operand']
  %s0 = inlined_call_operand.vmem [shape: bf16[8,18], index: 0, kind: input, shape index: {}]
  %s1 = inlined_call_operand.hbm [shape: bf16[3,128,128], index: 1, kind: input, shape index: {}]
  %s2 = inlined_call_operand.vmem [shape: f32[8,128], index: 2, kind: input, shape index: {}]
  %s3 = inlined_call_operand.hbm [shape: f32[8,8], index: 3, kind: output, shape index: {}]
  %s4 = sld [smem:[#allocation0]]
  $region26: #{actor_forward.1} parent=0
    _
  %s6 = ssub.s32 1, %s4
  %s7 = scalar_select 0, %s6, %s4
  $region1: #{actor_forward.1} parent=0
    #allocation3 [shape = 'u8[98304]{0}', space=vmem, size = 0x18000, scoped, tag = 'input window, operand 1, single buffered']
    #allocation4 [shape = 's32[1]{0}', space=sflag, size = 0x4, scoped, tag = 'scoped memory for actor_forward.1']
    #allocation5 [shape = 's32[1]{0}', space=sflag, size = 0x4, scoped, tag = 'scoped memory for actor_forward.1']
    #allocation6 [shape = 'u8[4096]{0}', space=vmem, size = 0x1000, scoped, tag = 'output window, operand 0, single buffered']
    %8 = vsyncpa [#allocation4], 0
    %9 = vsyncpa [#allocation5], 0
    // Predicated region
    $region2: #{actor_forward.1} parent=1 // pred_check
      _
    $region3: #{actor_forward.1} parent=1 // pred_check_branch
      %11 = sbr.rel (0) target = $region5
    $region4: #{actor_forward.1} parent=1 // pred_region
      _
    $region5: #{actor_forward.1} parent=1 // pred_fallthru
      _
    // Predicated region
    $region6: #{actor_forward.1} parent=1 // pred_check
      _
    $region7: #{actor_forward.1} parent=1 // pred_check_branch
      %13 = sbr.rel (0) target = $region9
    $region8: #{actor_forward.1} parent=1 // pred_region
      %s15 = ssub.s32 3072, 3072
      %16 = vsyncadd [#allocation4], %s15
      %s17 = sshll.u32 [#allocation3], 4
      %s18 = int_to_ptr.vmem [resolvable:$true] %s17
      %23 = dma.hbm_to_vmem [thread:$0]  %s1, 3072, %s18, [#allocation4], 64, 64, 4
    $region9: #{actor_forward.1} parent=1 // pred_fallthru
      _
    // Predicated region
    $region10: #{actor_forward.1} parent=1 // pred_check
      _
    $region11: #{actor_forward.1} parent=1 // pred_check_branch
      %25 = sbr.rel (0) target = $region13
    $region12: #{actor_forward.1} parent=1 // pred_region
      _
    $region13: #{actor_forward.1} parent=1 // pred_fallthru
      _
    // Predicated region
    $region14: #{actor_forward.1} parent=1 // pred_check
      _
    $region15: #{actor_forward.1} parent=1 // pred_check_branch
      %27 = sbr.rel (0) target = $region17
    $region16: #{actor_forward.1} parent=1 // pred_region
      %28 = dma.done [#allocation4], 3072
    $region17: #{actor_forward.1} parent=1 // pred_fallthru
      _
    %30 = vst [vmem:[#allocation2] sm:$0xf] 0
    %v31 = vld [vmem:[%s0] sm:$0xf]
    %vm32 = vcmask 142336
    %33 = vst.msk [vmem:[#allocation2] sm:$0xf] %vm32, %v31
    %v34 = vld [vmem:[#allocation2] sm:$0xf]
    %v35 = vld [vmem:[#allocation3] sm:$0xf]
    %v36 = vld [vmem:[#allocation3 + $0x4] sm:$0xf]
    %v37 = vld [vmem:[#allocation3 + $0x8] sm:$0xf]
    %v38 = vld [vmem:[#allocation3 + $0xc] sm:$0xf]
    %v39 = vld [vmem:[#allocation3 + $0x10] sm:$0xf]
    %v40 = vld [vmem:[#allocation3 + $0x14] sm:$0xf]
    %v41 = vld [vmem:[#allocation3 + $0x18] sm:$0xf]
    %v42 = vld [vmem:[#allocation3 + $0x1c] sm:$0xf]
    %v43 = vld [vmem:[#allocation3 + $0x20] sm:$0xf]
    %v44 = vld [vmem:[#allocation3 + $0x24] sm:$0xf]
    %v45 = vld [vmem:[#allocation3 + $0x28] sm:$0xf]
    %v46 = vld [vmem:[#allocation3 + $0x2c] sm:$0xf]
    %v47 = vld [vmem:[#allocation3 + $0x30] sm:$0xf]
    %v48 = vld [vmem:[#allocation3 + $0x34] sm:$0xf]
    %v49 = vld [vmem:[#allocation3 + $0x38] sm:$0xf]
    %v50 = vld [vmem:[#allocation3 + $0x3c] sm:$0xf]
    %v51 = vld [vmem:[%s2] sm:$0x1]
    %v52 = vlaneseq
    %v53 = vshrl.u32 %v52, 7
    %v54 = vsub.s32 0, %v53
    %v55 = vrot.slane %v51, %v54
    %v72 = vunpack.c.l.b16 %v35
    %v73 = vunpack.c.l.b16 %v36
    %v74 = vunpack.c.l.b16 %v37
    %v75 = vunpack.c.l.b16 %v38
    %v76 = vunpack.c.l.b16 %v39
    %v77 = vunpack.c.l.b16 %v40
    %v78 = vunpack.c.l.b16 %v41
    %v79 = vunpack.c.l.b16 %v42
    %v80 = vunpack.c.l.b16 %v43
    %v81 = vunpack.c.l.b16 %v44
    %v82 = vunpack.c.l.b16 %v45
    %v83 = vunpack.c.l.b16 %v46
    %v84 = vunpack.c.l.b16 %v47
    %v85 = vunpack.c.l.b16 %v48
    %v86 = vunpack.c.l.b16 %v49
    %v87 = vunpack.c.l.b16 %v50
    %v88 = vpack.c.b16 %v73, %v72
    %v89 = vpack.c.b16 %v75, %v74
    %v90 = vpack.c.b16 %v77, %v76
    %v91 = vpack.c.b16 %v79, %v78
    %v92 = vpack.c.b16 %v81, %v80
    %v93 = vpack.c.b16 %v83, %v82
    %v94 = vpack.c.b16 %v85, %v84
    %v95 = vpack.c.b16 %v87, %v86
    %104 = vmatprep.subr.bf16.mxu0 0
    %105 = vmatpush1.bf16.msra.mxu0 %v95
    %106 = vmatprep.subr.bf16.mxu0 0
    %107 = vmatpush1.bf16.msra.mxu0 %v94
    %108 = vmatprep.subr.bf16.mxu0 0
    %109 = vmatpush1.bf16.msra.mxu0 %v93
    %110 = vmatprep.subr.bf16.mxu0 0
    %111 = vmatpush1.bf16.msra.mxu0 %v92
    %112 = vmatprep.subr.bf16.mxu0 0
    %113 = vmatpush1.bf16.msra.mxu0 %v91
    %114 = vmatprep.subr.bf16.mxu0 0
    %115 = vmatpush1.bf16.msra.mxu0 %v90
    %116 = vmatprep.subr.bf16.mxu0 0
    %117 = vmatpush1.bf16.msra.mxu0 %v89
    %118 = vmatprep.subr.bf16.mxu0 0
    %119 = vmatpush1.bf16.msra.mxu0 %v88
    %120 = vmatprep.subr.bf16.mxu0 0
    %121 = vmatpush2.bf16.msra.mxu0 0
    %122 = vmatprep.subr.bf16.mxu0 0
    %123 = vmatpush2.bf16.msra.mxu0 0
    %124 = vmatprep.subr.bf16.mxu0 0
    %125 = vmatpush2.bf16.msra.mxu0 0
    %126 = vmatprep.subr.bf16.mxu0 0
    %127 = vmatpush2.bf16.msra.mxu0 0
    %128 = vmatprep.subr.bf16.mxu0 0
    %129 = vmatpush2.bf16.msra.mxu0 0
    %130 = vmatprep.subr.bf16.mxu0 0
    %131 = vmatpush2.bf16.msra.mxu0 0
    %132 = vmatprep.subr.bf16.mxu0 0
    %133 = vmatpush2.bf16.msra.mxu0 0
    %134 = vmatprep.subr.bf16.mxu0 0
    %135 = vmatpush2.bf16.msra.mxu0 0
    %136 = vmatprep.mubr.bf16.mxu0 0
    %137 = vmatmul.mubr.bf16.gmra.mxu0 %v34
    %v138 = vpop.f32.mrf.mxu0
    %v139 = vadd.f32 %v55, %v138
    %v140 = vpop.f32.mrf.mxu0
    %v141 = vpop.f32.mrf.mxu0
    %v142 = vpop.f32.mrf.mxu0
    %143 = vdwg.mxu0
    %v144 = vmax.f32 %v139, 0.0
    %v145 = vpack.c.bf16 %v144, %v144
    %s146 = scalar_lea.vmem [#allocation3], 64
    %v147 = vld [vmem:[%s146] sm:$0xf]
    %v148 = vld [vmem:[%s146 + $0x4] sm:$0xf]
    %v149 = vld [vmem:[%s146 + $0x8] sm:$0xf]
    %v150 = vld [vmem:[%s146 + $0xc] sm:$0xf]
    %v151 = vld [vmem:[%s146 + $0x10] sm:$0xf]
    %v152 = vld [vmem:[%s146 + $0x14] sm:$0xf]
    %v153 = vld [vmem:[%s146 + $0x18] sm:$0xf]
    %v154 = vld [vmem:[%s146 + $0x1c] sm:$0xf]
    %v155 = vld [vmem:[%s146 + $0x20] sm:$0xf]
    %v156 = vld [vmem:[%s146 + $0x24] sm:$0xf]
    %v157 = vld [vmem:[%s146 + $0x28] sm:$0xf]
    %v158 = vld [vmem:[%s146 + $0x2c] sm:$0xf]
    %v159 = vld [vmem:[%s146 + $0x30] sm:$0xf]
    %v160 = vld [vmem:[%s146 + $0x34] sm:$0xf]
    %v161 = vld [vmem:[%s146 + $0x38] sm:$0xf]
    %v162 = vld [vmem:[%s146 + $0x3c] sm:$0xf]
    %v163 = vld [vmem:[%s2 + $0x1] sm:$0x1]
    %v164 = vlaneseq
    %v165 = vshrl.u32 %v164, 7
    %v166 = vsub.s32 0, %v165
    %v167 = vrot.slane %v163, %v166
    %v184 = vunpack.c.l.b16 %v147
    %v185 = vunpack.c.l.b16 %v148
    %v186 = vunpack.c.l.b16 %v149
    %v187 = vunpack.c.l.b16 %v150
    %v188 = vunpack.c.l.b16 %v151
    %v189 = vunpack.c.l.b16 %v152
    %v190 = vunpack.c.l.b16 %v153
    %v191 = vunpack.c.l.b16 %v154
    %v192 = vunpack.c.l.b16 %v155
    %v193 = vunpack.c.l.b16 %v156
    %v194 = vunpack.c.l.b16 %v157
    %v195 = vunpack.c.l.b16 %v158
    %v196 = vunpack.c.l.b16 %v159
    %v197 = vunpack.c.l.b16 %v160
    %v198 = vunpack.c.l.b16 %v161
    %v199 = vunpack.c.l.b16 %v162
    %v200 = vpack.c.b16 %v185, %v184
    %v201 = vpack.c.b16 %v187, %v186
    %v202 = vpack.c.b16 %v189, %v188
    %v203 = vpack.c.b16 %v191, %v190
    %v204 = vpack.c.b16 %v193, %v192
    %v205 = vpack.c.b16 %v195, %v194
    %v206 = vpack.c.b16 %v197, %v196
    %v207 = vpack.c.b16 %v199, %v198
    %216 = vmatprep.subr.bf16.mxu0 0
    %217 = vmatpush1.bf16.msra.mxu0 %v207
    %218 = vmatprep.subr.bf16.mxu0 0
    %219 = vmatpush1.bf16.msra.mxu0 %v206
    %220 = vmatprep.subr.bf16.mxu0 0
    %221 = vmatpush1.bf16.msra.mxu0 %v205
    %222 = vmatprep.subr.bf16.mxu0 0
    %223 = vmatpush1.bf16.msra.mxu0 %v204
    %224 = vmatprep.subr.bf16.mxu0 0
    %225 = vmatpush1.bf16.msra.mxu0 %v203
    %226 = vmatprep.subr.bf16.mxu0 0
    %227 = vmatpush1.bf16.msra.mxu0 %v202
    %228 = vmatprep.subr.bf16.mxu0 0
    %229 = vmatpush1.bf16.msra.mxu0 %v201
    %230 = vmatprep.subr.bf16.mxu0 0
    %231 = vmatpush1.bf16.msra.mxu0 %v200
    %232 = vmatprep.subr.bf16.mxu0 0
    %233 = vmatpush2.bf16.msra.mxu0 0
    %234 = vmatprep.subr.bf16.mxu0 0
    %235 = vmatpush2.bf16.msra.mxu0 0
    %236 = vmatprep.subr.bf16.mxu0 0
    %237 = vmatpush2.bf16.msra.mxu0 0
    %238 = vmatprep.subr.bf16.mxu0 0
    %239 = vmatpush2.bf16.msra.mxu0 0
    %240 = vmatprep.subr.bf16.mxu0 0
    %241 = vmatpush2.bf16.msra.mxu0 0
    %242 = vmatprep.subr.bf16.mxu0 0
    %243 = vmatpush2.bf16.msra.mxu0 0
    %244 = vmatprep.subr.bf16.mxu0 0
    %245 = vmatpush2.bf16.msra.mxu0 0
    %246 = vmatprep.subr.bf16.mxu0 0
    %247 = vmatpush2.bf16.msra.mxu0 0
    %248 = vmatprep.mubr.bf16.mxu0 0
    %249 = vmatmul.mubr.bf16.gmra.mxu0 %v145
    %v250 = vpop.f32.mrf.mxu0
    %v251 = vadd.f32 %v167, %v250
    %v252 = vpop.f32.mrf.mxu0
    %v253 = vpop.f32.mrf.mxu0
    %v254 = vpop.f32.mrf.mxu0
    %255 = vdwg.mxu0
    %v256 = vmax.f32 %v251, 0.0
    %v257 = vpack.c.bf16 %v256, %v256
    %s258 = scalar_lea.vmem [#allocation3], 128
    %v259 = vld [vmem:[%s258] sm:$0xf]
    %v260 = vld [vmem:[%s258 + $0x4] sm:$0xf]
    %v261 = vld [vmem:[%s258 + $0x8] sm:$0xf]
    %v262 = vld [vmem:[%s258 + $0xc] sm:$0xf]
    %v263 = vld [vmem:[%s258 + $0x10] sm:$0xf]
    %v264 = vld [vmem:[%s258 + $0x14] sm:$0xf]
    %v265 = vld [vmem:[%s258 + $0x18] sm:$0xf]
    %v266 = vld [vmem:[%s258 + $0x1c] sm:$0xf]
    %v267 = vld [vmem:[%s258 + $0x20] sm:$0xf]
    %v268 = vld [vmem:[%s258 + $0x24] sm:$0xf]
    %v269 = vld [vmem:[%s258 + $0x28] sm:$0xf]
    %v270 = vld [vmem:[%s258 + $0x2c] sm:$0xf]
    %v271 = vld [vmem:[%s258 + $0x30] sm:$0xf]
    %v272 = vld [vmem:[%s258 + $0x34] sm:$0xf]
    %v273 = vld [vmem:[%s258 + $0x38] sm:$0xf]
    %v274 = vld [vmem:[%s258 + $0x3c] sm:$0xf]
    %v275 = vld [vmem:[%s2 + $0x2] sm:$0x1]
    %v276 = vlaneseq
    %v277 = vshrl.u32 %v276, 7
    %v278 = vsub.s32 0, %v277
    %v279 = vrot.slane %v275, %v278
    %v296 = vunpack.c.l.b16 %v259
    %v297 = vunpack.c.l.b16 %v260
    %v298 = vunpack.c.l.b16 %v261
    %v299 = vunpack.c.l.b16 %v262
    %v300 = vunpack.c.l.b16 %v263
    %v301 = vunpack.c.l.b16 %v264
    %v302 = vunpack.c.l.b16 %v265
    %v303 = vunpack.c.l.b16 %v266
    %v304 = vunpack.c.l.b16 %v267
    %v305 = vunpack.c.l.b16 %v268
    %v306 = vunpack.c.l.b16 %v269
    %v307 = vunpack.c.l.b16 %v270
    %v308 = vunpack.c.l.b16 %v271
    %v309 = vunpack.c.l.b16 %v272
    %v310 = vunpack.c.l.b16 %v273
    %v311 = vunpack.c.l.b16 %v274
    %v312 = vpack.c.b16 %v297, %v296
    %v313 = vpack.c.b16 %v299, %v298
    %v314 = vpack.c.b16 %v301, %v300
    %v315 = vpack.c.b16 %v303, %v302
    %v316 = vpack.c.b16 %v305, %v304
    %v317 = vpack.c.b16 %v307, %v306
    %v318 = vpack.c.b16 %v309, %v308
    %v319 = vpack.c.b16 %v311, %v310
    %328 = vmatprep.subr.bf16.mxu0 0
    %329 = vmatpush1.bf16.msra.mxu0 %v319
    %330 = vmatprep.subr.bf16.mxu0 0
    %331 = vmatpush1.bf16.msra.mxu0 %v318
    %332 = vmatprep.subr.bf16.mxu0 0
    %333 = vmatpush1.bf16.msra.mxu0 %v317
    %334 = vmatprep.subr.bf16.mxu0 0
    %335 = vmatpush1.bf16.msra.mxu0 %v316
    %336 = vmatprep.subr.bf16.mxu0 0
    %337 = vmatpush1.bf16.msra.mxu0 %v315
    %338 = vmatprep.subr.bf16.mxu0 0
    %339 = vmatpush1.bf16.msra.mxu0 %v314
    %340 = vmatprep.subr.bf16.mxu0 0
    %341 = vmatpush1.bf16.msra.mxu0 %v313
    %342 = vmatprep.subr.bf16.mxu0 0
    %343 = vmatpush1.bf16.msra.mxu0 %v312
    %344 = vmatprep.subr.bf16.mxu0 0
    %345 = vmatpush2.bf16.msra.mxu0 0
    %346 = vmatprep.subr.bf16.mxu0 0
    %347 = vmatpush2.bf16.msra.mxu0 0
    %348 = vmatprep.subr.bf16.mxu0 0
    %349 = vmatpush2.bf16.msra.mxu0 0
    %350 = vmatprep.subr.bf16.mxu0 0
    %351 = vmatpush2.bf16.msra.mxu0 0
    %352 = vmatprep.subr.bf16.mxu0 0
    %353 = vmatpush2.bf16.msra.mxu0 0
    %354 = vmatprep.subr.bf16.mxu0 0
    %355 = vmatpush2.bf16.msra.mxu0 0
    %356 = vmatprep.subr.bf16.mxu0 0
    %357 = vmatpush2.bf16.msra.mxu0 0
    %358 = vmatprep.subr.bf16.mxu0 0
    %359 = vmatpush2.bf16.msra.mxu0 0
    %360 = vmatprep.mubr.bf16.mxu0 0
    %361 = vmatmul.mubr.bf16.gmra.mxu0 %v257
    %v362 = vpop.f32.mrf.mxu0
    %v363 = vadd.f32 %v279, %v362
    %v364 = vpop.f32.mrf.mxu0
    %v365 = vpop.f32.mrf.mxu0
    %v366 = vpop.f32.mrf.mxu0
    %367 = vdwg.mxu0
    %vm368 = vcmask 64512
    %369 = vst.msk [vmem:[#allocation6] sm:$0xff] %vm368, %v363
    // Predicated region
    $region18: #{actor_forward.1} parent=1 // pred_check
      _
    $region19: #{actor_forward.1} parent=1 // pred_check_branch
      %371 = sbr.rel (0) target = $region21
    $region20: #{actor_forward.1} parent=1 // pred_region
      %s373 = ssub.s32 128, 128
      %374 = vsyncadd [#allocation5], %s373
      %s376 = sshll.u32 [#allocation6], 4
      %s377 = int_to_ptr.vmem [resolvable:$true] %s376
      %379 = dma.vmem_to_hbm [thread:$0]  %s377, 128, %s3, [#allocation5]
    $region21: #{actor_forward.1} parent=1 // pred_fallthru
      _
    // Predicated region
    $region22: #{actor_forward.1} parent=1 // pred_check
      _
    $region23: #{actor_forward.1} parent=1 // pred_check_branch
      %381 = sbr.rel (0) target = $region25
    $region24: #{actor_forward.1} parent=1 // pred_region
      %382 = dma.done [#allocation5], 128
    $region25: #{actor_forward.1} parent=1 // pred_fallthru
      _
    %383 = vsyncpa [#allocation4], 1
    %384 = vsyncpa [#allocation5], 1

</llo_original>
